<compile_context>
chip_gen: v7x
topology: tpu7x:2x2x1
jax: 0.10.0
libtpu: 0.0.40
codegen_flags: <defaults>
</compile_context>

<pallas_src>
import functools

import numpy as np
import jax
import jax.numpy as jnp
from jax.experimental import pallas as pl
from jax.experimental.pallas import tpu as pltpu

EPS = 1e-6
LANE = 128
DEFAULT_TILE_N = 4096            # review: 4096-16384 row tiles (multiple of 128)
RESIDENT_U_BUDGET = 20 << 20     # ~20 MiB of resident u: safe within v7x's 64 MiB VMEM


def _round_up(a, m):
    return ((a + m - 1) // m) * m


# ----------------------------------------------------------------------------
# MADE mask construction (static, plain numpy)
# ----------------------------------------------------------------------------
def made_degrees(in_size, hidden_sizes, input_order="reverse"):
    if input_order == "reverse":
        m0 = np.arange(in_size, 0, -1)          # [D, D-1, ..., 1]
    else:
        m0 = np.arange(1, in_size + 1)
    degrees = [m0]
    for h in hidden_sizes:
        md = (np.arange(h) % max(1, in_size - 1)) + 1
        degrees.append(md)
    return degrees


def made_masks(in_size, hidden_sizes, input_order="reverse"):
    degs = made_degrees(in_size, hidden_sizes, input_order)
    masks = []
    for l in range(len(hidden_sizes)):
        m_prev, m_cur = degs[l], degs[l + 1]
        masks.append((m_cur[None, :] >= m_prev[:, None]).astype(np.float32))
    m_last, m_out = degs[-1], degs[0]
    out_mask = (m_out[None, :] > m_last[:, None]).astype(np.float32)
    return masks, out_mask


# ----------------------------------------------------------------------------
# In-kernel building blocks (batch-on-lanes / transposed layout)
# ----------------------------------------------------------------------------
def _made_block(xt, w1, b1, w2, b2, wh, bh, d):
    """MADE forward on one (D, T) slab. Returns u^T (D, T), logdet_made (1, T)."""
    bf16 = jnp.bfloat16
    f32 = jnp.float32
    # bf16 MXU inputs / f32 accumulation.  (v5e note: the activation casts are
    # pure VALU filler there; drop them if the bundle shows VALU binding.)
    h1 = jnp.dot(w1, xt.astype(bf16), preferred_element_type=f32) + b1
    h1 = jnp.maximum(h1, 0.0)
    h2 = jnp.dot(w2, h1.astype(bf16), preferred_element_type=f32) + b2
    h2 = jnp.maximum(h2, 0.0)
    # fused (mu | log_sigma_sq) head: one (2D, H2) x (H2, T) matmul; split below
    # is a sublane split at a multiple of 8 (free), not a mid-vreg lane split.
    head = jnp.dot(wh, h2.astype(bf16), preferred_element_type=f32) + bh
    mu = head[:d, :]
    ls = head[d:, :]
    u = (xt - mu) * jnp.exp(-0.5 * ls)                       # (D, T) lane-dense
    ld = jnp.sum(-0.5 * ls, axis=0, keepdims=True)           # (1, T)
    return u, ld


def _tile_stats(u, tile_start, n_valid, needs_mask):
    """Per-feature sum / sum-of-squares over the tile's batch (lane) axis,
    excluding zero-padded tail columns."""
    if needs_mask:
        col = jax.lax.broadcasted_iota(jnp.int32, u.shape, 1) + tile_start
        w = jnp.where(col < n_valid, 1.0, 0.0).astype(u.dtype)
        uw = u * w
    else:
        uw = u
    return (jnp.sum(uw, axis=1, keepdims=True),
            jnp.sum(uw * u, axis=1, keepdims=True))


def _bn_coeffs(s, ss, gamma, beta, inv_n):
    """Fold full-batch BatchNorm into one scale-and-shift + its logdet term."""
    bmu = s * inv_n                                           # (D, 1)
    bvar = ss * inv_n - bmu * bmu + EPS                       # var + eps (PyTorch)
    scale = jax.lax.rsqrt(bvar) * jnp.exp(gamma)              # (D, 1)
    shift = beta - bmu * scale                                # (D, 1)
    # NOTE: the double eps in log(bvar + EPS) intentionally matches PyTorch
    # (running_var already contains +eps).
    ld_bn = jnp.sum(gamma - 0.5 * jnp.log(bvar + EPS), keepdims=True)   # (1, 1)
    return scale, shift, ld_bn


# ----------------------------------------------------------------------------
# Fused kernel: grid = (2, n_tiles);  phase 0 = MADE + stats, phase 1 = BN apply
# ----------------------------------------------------------------------------
def fused_kernel(xt_ref, w1_ref, b1_ref, w2_ref, b2_ref, wh_ref, bh_ref,
                 gamma_ref, beta_ref, ld_ref, u_ref, *scratch,
                 d, tile_n, n_valid, n_pad, inv_n, resident):
    if resident:
        u_res, ld_res, sum_res, sumsq_res = scratch
    else:
        sum_res, sumsq_res = scratch
    phase = pl.program_id(0)
    i = pl.program_id(1)
    needs_mask = n_valid != n_pad

    @pl.when(phase == 0)
    def _made_phase():
        @pl.when(i == 0)
        def _init():
            sum_res[...] = jnp.zeros_like(sum_res)
            sumsq_res[...] = jnp.zeros_like(sumsq_res)

        u, ld = _made_block(xt_ref[...], w1_ref[...], b1_ref[...],
                            w2_ref[...], b2_ref[...], wh_ref[...], bh_ref[...], d)
        if resident:
            u_res[i] = u            # keep u on-chip for phase 1 (no HBM round trip)
            ld_res[i] = ld
        s, ss = _tile_stats(u, i * tile_n, n_valid, needs_mask)
        sum_res[...] += s
        sumsq_res[...] += ss

    @pl.when(phase == 1)
    def _bn_phase():
        scale, shift, ld_bn = _bn_coeffs(sum_res[...], sumsq_res[...],
                                         gamma_ref[...], beta_ref[...], inv_n)
        if resident:
            u, ld = u_res[i], ld_res[i]
        else:
            # residency fallback for large N: recompute the MADE block from x
            # (compute has plenty of slack; still fewer HBM bytes than two passes)
            u, ld = _made_block(xt_ref[...], w1_ref[...], b1_ref[...],
                                w2_ref[...], b2_ref[...], wh_ref[...], bh_ref[...], d)
        u_ref[...] = u * scale + shift                        # (D, T) lane-dense store
        ld_ref[...] = ld + ld_bn                              # (1, T) lane-dense store


# ----------------------------------------------------------------------------
# Wrapper
# ----------------------------------------------------------------------------
def gaussian_made_bn_forward(x, params, tile_n=None,
                             resident_budget_bytes=RESIDENT_U_BUDGET):
    """x: (N, D) float32. Returns (log_det_du_dx (N,), u (N, D))."""
    N, D = x.shape
    H1 = params["w1t"].shape[0]
    H2 = params["w2t"].shape[0]
    f32 = jnp.float32

    if tile_n is None:
        tile_n = DEFAULT_TILE_N
    tile_n = _round_up(min(tile_n, _round_up(N, LANE)), LANE)
    n_tiles = -(-N // tile_n)
    n_pad = n_tiles * tile_n

    # residency check for keeping u / logdet_made on-chip between phases
    # (logdet rows are sublane-padded to 8 in VMEM, hence the +8)
    d_pad = _round_up(D, 8)
    resident_bytes = n_pad * 4 * (d_pad + 8)
    resident = resident_bytes <= resident_budget_bytes

    # batch-on-lanes layout: x^T, zero-padded up to the tile multiple
    xt = x.T
    if n_pad != N:
        xt = jnp.pad(xt, ((0, 0), (0, n_pad - N)))

    const = lambda shape: pl.BlockSpec(shape, lambda p, i: (0, 0))  # VMEM-resident
    if resident:
        x_map = lambda p, i: (0, i * (1 - p))   # phase 1 pins to tile 0 (unused)
    else:
        x_map = lambda p, i: (0, i)             # phase 1 re-reads x (recompute mode)
    out_map = lambda p, i: (0, i * p)           # only phase 1 writes real blocks

    in_specs = [
        pl.BlockSpec((D, tile_n), x_map),                     # x^T
        const((H1, D)), const((H1, 1)),                       # w1^T, b1
        const((H2, H1)), const((H2, 1)),                      # w2^T, b2
        const((2 * D, H2)), const((2 * D, 1)),                # fused head
        const((D, 1)), const((D, 1)),                         # gamma, beta
    ]
    out_specs = (
        pl.BlockSpec((1, tile_n), out_map),                   # logdet total (1, N)
        pl.BlockSpec((D, tile_n), out_map),                   # u_bn^T       (D, N)
    )
    out_shape = (
        jax.ShapeDtypeStruct((1, n_pad), f32),
        jax.ShapeDtypeStruct((D, n_pad), f32),
    )

    scratch = [pltpu.VMEM((D, 1), f32), pltpu.VMEM((D, 1), f32)]   # sum, sumsq
    if resident:
        scratch = [pltpu.VMEM((n_tiles, D, tile_n), f32),          # resident u
                   pltpu.VMEM((n_tiles, 1, tile_n), f32)] + scratch  # resident logdet

    # explicit VMEM budget (v7x has 64 MiB physical / 32 MiB default scoped)
    block_bytes = D * tile_n * 4
    vmem_limit = int(min(max(32 << 20,
                             (resident_bytes if resident else 0)
                             + 8 * block_bytes + (4 << 20)),
                         100 << 20))

    made_passes = 1 if resident else 2
    matmul_flops = 2 * N * (D * H1 + H1 * H2 + H2 * 2 * D)
    cost = pl.CostEstimate(
        flops=int(made_passes * matmul_flops + 16 * N * D),
        transcendentals=int(made_passes * N * D + 8 * D),
        bytes_accessed=int(4 * (D * n_pad * (2 if resident else 3) + n_pad)),
    )

    ld_t, u_t = pl.pallas_call(
        functools.partial(fused_kernel, d=D, tile_n=tile_n, n_valid=N,
                          n_pad=n_pad, inv_n=1.0 / N, resident=resident),
        grid=(2, n_tiles),
        in_specs=in_specs,
        out_specs=out_specs,
        out_shape=out_shape,
        scratch_shapes=scratch,
        compiler_params=pltpu.CompilerParams(
            # cross-tile stat / residency dependence -> both axes 'arbitrary'
            dimension_semantics=("arbitrary", "arbitrary"),
            vmem_limit_bytes=vmem_limit),
        cost_estimate=cost,
    )(xt, params["w1t"], params["b1t"], params["w2t"], params["b2t"],
      params["wht"], params["bht"], params["gamma_t"], params["beta_t"])

    logdet = ld_t[0, :N]
    u_bn = u_t[:, :N].T
    return logdet, u_bn


# ----------------------------------------------------------------------------
# Parameter construction (deterministic) + pure-JAX reference for verification
# ----------------------------------------------------------------------------
def make_params(key, in_size, hidden_sizes, input_order="reverse"):
    masks, out_mask = made_masks(in_size, hidden_sizes, input_order)
    h1, h2 = hidden_sizes
    k1, k2, k3, k4, k5, k6, k7 = jax.random.split(key, 7)
    s = 0.1
    bf16, f32 = jnp.bfloat16, jnp.float32
    # weights stored pre-transposed (out, in) for the batch-on-lanes kernel layout
    w1t = (s * jax.random.normal(k1, (h1, in_size), f32) * masks[0].T).astype(bf16)
    w2t = (s * jax.random.normal(k2, (h2, h1), f32) * masks[1].T).astype(bf16)
    wmu_t = s * jax.random.normal(k3, (in_size, h2), f32) * out_mask.T
    wls_t = s * jax.random.normal(k4, (in_size, h2), f32) * out_mask.T
    wht = jnp.concatenate([wmu_t, wls_t], axis=0).astype(bf16)     # fused (2D, H2)
    return {
        "w1t": w1t, "b1t": 0.01 * jax.random.normal(k5, (h1, 1), f32),
        "w2t": w2t, "b2t": 0.01 * jax.random.normal(k6, (h2, 1), f32),
        "wht": wht, "bht": 0.01 * jax.random.normal(k7, (2 * in_size, 1), f32),
        "gamma_t": jnp.ones((in_size, 1), f32),    # nn.Parameter(torch.ones)
        "beta_t": jnp.zeros((in_size, 1), f32),    # nn.Parameter(torch.zeros)
    }


def reference_forward(x, p):
    """Pure-JAX mirror of the kernel math (bf16 MXU inputs / f32 accumulation)."""
    bf16, f32 = jnp.bfloat16, jnp.float32

    def mm(w, a):
        return jnp.dot(w, a.astype(bf16), preferred_element_type=f32)

    D = x.shape[1]
    xt = x.T                                                  # (D, N)
    h1 = jax.nn.relu(mm(p["w1t"], xt) + p["b1t"])
    h2 = jax.nn.relu(mm(p["w2t"], h1) + p["b2t"])
    head = mm(p["wht"], h2) + p["bht"]
    mu, ls = head[:D], head[D:]
    u = (xt - mu) * jnp.exp(-0.5 * ls)                        # (D, N)
    ld1 = jnp.sum(-0.5 * ls, axis=0)                          # (N,)
    bmu = jnp.mean(u, axis=1, keepdims=True)
    bvar = jnp.mean((u - bmu) ** 2, axis=1, keepdims=True) + EPS
    u_bn = (u - bmu) / jnp.sqrt(bvar) * jnp.exp(p["gamma_t"]) + p["beta_t"]
    ld2 = jnp.sum(p["gamma_t"] - 0.5 * jnp.log(bvar + EPS))   # double-eps: PyTorch
    return ld1 + ld2, u_bn.T


if __name__ == "__main__":
    N, D = 500, 16                      # awkward N: exercises padding + tail masking
    hidden_sizes = [32, 32]

    key = jax.random.PRNGKey(0)
    kx, kp = jax.random.split(key)
    x = jax.random.normal(kx, (N, D), jnp.float32)
    params = make_params(kp, D, hidden_sizes, input_order="reverse")

    ref_ld, ref_u = reference_forward(x, params)

    # 1) fused resident path: 4 tiles of 128 rows, phases + stat accumulation
    ld, u = gaussian_made_bn_forward(x, params, tile_n=128)
    jax.block_until_ready((ld, u))
    np.testing.assert_allclose(np.asarray(ld), np.asarray(ref_ld), rtol=2e-3, atol=2e-3)
    np.testing.assert_allclose(np.asarray(u), np.asarray(ref_u), rtol=2e-3, atol=2e-3)

    # 2) large-N fallback path (recompute instead of resident u), forced here
    ld2, u2 = gaussian_made_bn_forward(x, params, tile_n=128, resident_budget_bytes=0)
    jax.block_until_ready((ld2, u2))
    np.testing.assert_allclose(np.asarray(ld2), np.asarray(ref_ld), rtol=2e-3, atol=2e-3)
    np.testing.assert_allclose(np.asarray(u2), np.asarray(ref_u), rtol=2e-3, atol=2e-3)

    # 3) default tile selection (single 512-row tile)
    ld3, u3 = gaussian_made_bn_forward(x, params)
    jax.block_until_ready((ld3, u3))
    np.testing.assert_allclose(np.asarray(ld3), np.asarray(ref_ld), rtol=2e-3, atol=2e-3)
    np.testing.assert_allclose(np.asarray(u3), np.asarray(ref_u), rtol=2e-3, atol=2e-3)

    print("KERNEL_OK")
</pallas_src>

<mosaic_0001>
module attributes {stable_mosaic.version = 11 : i64} {
  func.func @fused_kernel(%arg0: i32, %arg1: i32, %arg2: memref<16x128xf32, #tpu.memory_space<vmem>>, %arg3: memref<32x16xbf16, #tpu.memory_space<vmem>>, %arg4: memref<32x1xf32, #tpu.memory_space<vmem>>, %arg5: memref<32x32xbf16, #tpu.memory_space<vmem>>, %arg6: memref<32x1xf32, #tpu.memory_space<vmem>>, %arg7: memref<32x32xbf16, #tpu.memory_space<vmem>>, %arg8: memref<32x1xf32, #tpu.memory_space<vmem>>, %arg9: memref<16x1xf32, #tpu.memory_space<vmem>>, %arg10: memref<16x1xf32, #tpu.memory_space<vmem>>, %arg11: memref<1x128xf32, #tpu.memory_space<vmem>>, %arg12: memref<16x128xf32, #tpu.memory_space<vmem>>, %arg13: memref<4x16x128xf32, #tpu.memory_space<vmem>>, %arg14: memref<4x1x128xf32, #tpu.memory_space<vmem>>, %arg15: memref<16x1xf32, #tpu.memory_space<vmem>>, %arg16: memref<16x1xf32, #tpu.memory_space<vmem>>) attributes {dimension_semantics = [#tpu.dimension_semantics<arbitrary>, #tpu.dimension_semantics<arbitrary>], iteration_bounds = array<i64: 2, 4>, scalar_prefetch = 0 : i64, scratch_operands = 4 : i64, tpu.core_type = #tpu.core_type<tc>, window_params = [{transform_indices = @transform_0, window_bounds = array<i64: 16, 128>}, {pipeline_mode = #tpu.pipeline_mode<synchronous>, transform_indices = @transform_1, window_bounds = array<i64: 32, 16>}, {pipeline_mode = #tpu.pipeline_mode<synchronous>, transform_indices = @transform_2, window_bounds = array<i64: 32, 1>}, {pipeline_mode = #tpu.pipeline_mode<synchronous>, transform_indices = @transform_3, window_bounds = array<i64: 32, 32>}, {pipeline_mode = #tpu.pipeline_mode<synchronous>, transform_indices = @transform_4, window_bounds = array<i64: 32, 1>}, {pipeline_mode = #tpu.pipeline_mode<synchronous>, transform_indices = @transform_5, window_bounds = array<i64: 32, 32>}, {pipeline_mode = #tpu.pipeline_mode<synchronous>, transform_indices = @transform_6, window_bounds = array<i64: 32, 1>}, {pipeline_mode = #tpu.pipeline_mode<synchronous>, transform_indices = @transform_7, window_bounds = array<i64: 16, 1>}, {pipeline_mode = #tpu.pipeline_mode<synchronous>, transform_indices = @transform_8, window_bounds = array<i64: 16, 1>}, {transform_indices = @transform_9, window_bounds = array<i64: 1, 128>}, {transform_indices = @transform_10, window_bounds = array<i64: 16, 128>}]} {
    %c0_i32 = arith.constant 0 : i32
    %0 = arith.cmpi eq, %arg0, %c0_i32 : i32
    %1 = arith.extui %0 : i1 to i32
    %c0_i32_0 = arith.constant 0 : i32
    %2 = arith.cmpi ne, %1, %c0_i32_0 : i32
    scf.if %2 {
      %c0_i32_2 = arith.constant 0 : i32
      %6 = arith.cmpi eq, %arg1, %c0_i32_2 : i32
      %7 = arith.extui %6 : i1 to i32
      %c0_i32_3 = arith.constant 0 : i32
      %8 = arith.cmpi ne, %7, %c0_i32_3 : i32
      scf.if %8 {
        %cst_40 = arith.constant 0.000000e+00 : f32
        %72 = vector.broadcast %cst_40 : f32 to vector<16x1xf32>
        %c0_41 = arith.constant 0 : index
        %c0_42 = arith.constant 0 : index
        %73 = vector.load %arg15[%c0_41, %c0_42] : memref<16x1xf32, #tpu.memory_space<vmem>>, vector<16x1xf32>
        tpu.vector_store %arg15[%c0_41, %c0_42], %72 {strides = array<i32>} : memref<16x1xf32, #tpu.memory_space<vmem>>, vector<16x1xf32>,
        %cst_43 = arith.constant 0.000000e+00 : f32
        %74 = vector.broadcast %cst_43 : f32 to vector<16x1xf32>
        %c0_44 = arith.constant 0 : index
        %c0_45 = arith.constant 0 : index
        %75 = vector.load %arg16[%c0_44, %c0_45] : memref<16x1xf32, #tpu.memory_space<vmem>>, vector<16x1xf32>
        tpu.vector_store %arg16[%c0_44, %c0_45], %74 {strides = array<i32>} : memref<16x1xf32, #tpu.memory_space<vmem>>, vector<16x1xf32>,
      } else {
      }
      %c0 = arith.constant 0 : index
      %c0_4 = arith.constant 0 : index
      %9 = vector.load %arg2[%c0, %c0_4] : memref<16x128xf32, #tpu.memory_space<vmem>>, vector<16x128xf32>
      %c0_5 = arith.constant 0 : index
      %c0_6 = arith.constant 0 : index
      %10 = vector.load %arg3[%c0_5, %c0_6] : memref<32x16xbf16, #tpu.memory_space<vmem>>, vector<32x16xbf16>
      %c0_7 = arith.constant 0 : index
      %c0_8 = arith.constant 0 : index
      %11 = vector.load %arg4[%c0_7, %c0_8] : memref<32x1xf32, #tpu.memory_space<vmem>>, vector<32x1xf32>
      %c0_9 = arith.constant 0 : index
      %c0_10 = arith.constant 0 : index
      %12 = vector.load %arg5[%c0_9, %c0_10] : memref<32x32xbf16, #tpu.memory_space<vmem>>, vector<32x32xbf16>
      %c0_11 = arith.constant 0 : index
      %c0_12 = arith.constant 0 : index
      %13 = vector.load %arg6[%c0_11, %c0_12] : memref<32x1xf32, #tpu.memory_space<vmem>>, vector<32x1xf32>
      %c0_13 = arith.constant 0 : index
      %c0_14 = arith.constant 0 : index
      %14 = vector.load %arg7[%c0_13, %c0_14] : memref<32x32xbf16, #tpu.memory_space<vmem>>, vector<32x32xbf16>
      %c0_15 = arith.constant 0 : index
      %c0_16 = arith.constant 0 : index
      %15 = vector.load %arg8[%c0_15, %c0_16] : memref<32x1xf32, #tpu.memory_space<vmem>>, vector<32x1xf32>
      %16 = arith.truncf %9 : vector<16x128xf32> to vector<16x128xbf16>
      %cst = arith.constant dense<0.000000e+00> : vector<32x128xf32>
      %17 = tpu.matmul %10, %16, %cst {dimension_numbers = #tpu.dot_dimension_numbers<[1], [0], [0], [1], [0, 0, 1, 1], [], []>} : vector<32x16xbf16>, vector<16x128xbf16>, vector<32x128xf32> -> vector<32x128xf32>
      %18 = vector.broadcast %11 : vector<32x1xf32> to vector<32x128xf32>
      %19 = arith.addf %17, %18 : vector<32x128xf32>
      %cst_17 = arith.constant 0.000000e+00 : f32
      %20 = vector.broadcast %cst_17 : f32 to vector<32x128xf32>
      %21 = arith.maximumf %19, %20 : vector<32x128xf32>
      %22 = arith.truncf %21 : vector<32x128xf32> to vector<32x128xbf16>
      %cst_18 = arith.constant dense<0.000000e+00> : vector<32x128xf32>
      %23 = tpu.matmul %12, %22, %cst_18 {dimension_numbers = #tpu.dot_dimension_numbers<[1], [0], [0], [1], [0, 0, 1, 1], [], []>} : vector<32x32xbf16>, vector<32x128xbf16>, vector<32x128xf32> -> vector<32x128xf32>
      %24 = vector.broadcast %13 : vector<32x1xf32> to vector<32x128xf32>
      %25 = arith.addf %23, %24 : vector<32x128xf32>
      %cst_19 = arith.constant 0.000000e+00 : f32
      %26 = vector.broadcast %cst_19 : f32 to vector<32x128xf32>
      %27 = arith.maximumf %25, %26 : vector<32x128xf32>
      %28 = arith.truncf %27 : vector<32x128xf32> to vector<32x128xbf16>
      %cst_20 = arith.constant dense<0.000000e+00> : vector<32x128xf32>
      %29 = tpu.matmul %14, %28, %cst_20 {dimension_numbers = #tpu.dot_dimension_numbers<[1], [0], [0], [1], [0, 0, 1, 1], [], []>} : vector<32x32xbf16>, vector<32x128xbf16>, vector<32x128xf32> -> vector<32x128xf32>
      %30 = vector.broadcast %15 : vector<32x1xf32> to vector<32x128xf32>
      %31 = arith.addf %29, %30 : vector<32x128xf32>
      %32 = vector.extract_strided_slice %31 {offsets = [0, 0], sizes = [16, 128], strides = [1, 1]} : vector<32x128xf32> to vector<16x128xf32>
      %33 = vector.extract_strided_slice %31 {offsets = [16, 0], sizes = [16, 128], strides = [1, 1]} : vector<32x128xf32> to vector<16x128xf32>
      %34 = arith.subf %9, %32 : vector<16x128xf32>
      %cst_21 = arith.constant -5.000000e-01 : f32
      %35 = vector.broadcast %cst_21 : f32 to vector<16x128xf32>
      %36 = arith.mulf %35, %33 : vector<16x128xf32>
      %37 = math.exp %36 : vector<16x128xf32>
      %38 = arith.mulf %34, %37 : vector<16x128xf32>
      %cst_22 = arith.constant -5.000000e-01 : f32
      %39 = vector.broadcast %cst_22 : f32 to vector<16x128xf32>
      %40 = arith.mulf %39, %33 : vector<16x128xf32>
      %cst_23 = arith.constant dense<0.000000e+00> : vector<128xf32>
      %41 = vector.multi_reduction <add>, %40, %cst_23 [0] : vector<16x128xf32> to vector<128xf32>
      %42 = vector.shape_cast %41 : vector<128xf32> to vector<1x128xf32>
      %43 = arith.index_cast %arg1 : i32 to index
      %c0_24 = arith.constant 0 : index
      %c0_25 = arith.constant 0 : index
      %44 = vector.load %arg13[%43, %c0_24, %c0_25] : memref<4x16x128xf32, #tpu.memory_space<vmem>>, vector<1x16x128xf32>
      %45 = vector.shape_cast %44 : vector<1x16x128xf32> to vector<16x128xf32>
      %46 = vector.shape_cast %38 : vector<16x128xf32> to vector<1x16x128xf32>
      tpu.vector_store %arg13[%43, %c0_24, %c0_25], %46 {strides = array<i32>} : memref<4x16x128xf32, #tpu.memory_space<vmem>>, vector<1x16x128xf32>,
      %47 = arith.index_cast %arg1 : i32 to index
      %c0_26 = arith.constant 0 : index
      %c0_27 = arith.constant 0 : index
      %48 = vector.load %arg14[%47, %c0_26, %c0_27] : memref<4x1x128xf32, #tpu.memory_space<vmem>>, vector<1x1x128xf32>
      %49 = vector.shape_cast %48 : vector<1x1x128xf32> to vector<1x128xf32>
      %50 = vector.shape_cast %42 : vector<1x128xf32> to vector<1x1x128xf32>
      tpu.vector_store %arg14[%47, %c0_26, %c0_27], %50 {strides = array<i32>} : memref<4x1x128xf32, #tpu.memory_space<vmem>>, vector<1x1x128xf32>,
      %c128_i32 = arith.constant 128 : i32
      %51 = arith.muli %arg1, %c128_i32 : i32
      %52 = tpu.iota {dimensions = array<i32: 1>} : vector<16x128xi32>
      %53 = vector.broadcast %51 : i32 to vector<16x128xi32>
      %54 = arith.addi %52, %53 : vector<16x128xi32>
      %c500_i32 = arith.constant 500 : i32
      %55 = vector.broadcast %c500_i32 : i32 to vector<16x128xi32>
      %56 = arith.cmpi slt, %54, %55 : vector<16x128xi32>
      %cst_28 = arith.constant 1.000000e+00 : f32
      %cst_29 = arith.constant 0.000000e+00 : f32
      %57 = vector.broadcast %cst_28 : f32 to vector<16x128xf32>
      %58 = vector.broadcast %cst_29 : f32 to vector<16x128xf32>
      %59 = arith.select %56, %57, %58 : vector<16x128xi1>, vector<16x128xf32>
      %60 = arith.mulf %38, %59 : vector<16x128xf32>
      %cst_30 = arith.constant dense<0.000000e+00> : vector<16xf32>
      %61 = vector.multi_reduction <add>, %60, %cst_30 [1] : vector<16x128xf32> to vector<16xf32>
      %62 = vector.shape_cast %61 : vector<16xf32> to vector<16x1xf32>
      %63 = arith.mulf %60, %38 : vector<16x128xf32>
      %cst_31 = arith.constant dense<0.000000e+00> : vector<16xf32>
      %64 = vector.multi_reduction <add>, %63, %cst_31 [1] : vector<16x128xf32> to vector<16xf32>
      %65 = vector.shape_cast %64 : vector<16xf32> to vector<16x1xf32>
      %c0_32 = arith.constant 0 : index
      %c0_33 = arith.constant 0 : index
      %66 = vector.load %arg15[%c0_32, %c0_33] : memref<16x1xf32, #tpu.memory_space<vmem>>, vector<16x1xf32>
      %67 = arith.addf %66, %62 : vector<16x1xf32>
      %c0_34 = arith.constant 0 : index
      %c0_35 = arith.constant 0 : index
      %68 = vector.load %arg15[%c0_34, %c0_35] : memref<16x1xf32, #tpu.memory_space<vmem>>, vector<16x1xf32>
      tpu.vector_store %arg15[%c0_34, %c0_35], %67 {strides = array<i32>} : memref<16x1xf32, #tpu.memory_space<vmem>>, vector<16x1xf32>,
      %c0_36 = arith.constant 0 : index
      %c0_37 = arith.constant 0 : index
      %69 = vector.load %arg16[%c0_36, %c0_37] : memref<16x1xf32, #tpu.memory_space<vmem>>, vector<16x1xf32>
      %70 = arith.addf %69, %65 : vector<16x1xf32>
      %c0_38 = arith.constant 0 : index
      %c0_39 = arith.constant 0 : index
      %71 = vector.load %arg16[%c0_38, %c0_39] : memref<16x1xf32, #tpu.memory_space<vmem>>, vector<16x1xf32>
      tpu.vector_store %arg16[%c0_38, %c0_39], %70 {strides = array<i32>} : memref<16x1xf32, #tpu.memory_space<vmem>>, vector<16x1xf32>,
    } else {
    }
    %c1_i32 = arith.constant 1 : i32
    %3 = arith.cmpi eq, %arg0, %c1_i32 : i32
    %4 = arith.extui %3 : i1 to i32
    %c0_i32_1 = arith.constant 0 : i32
    %5 = arith.cmpi ne, %4, %c0_i32_1 : i32
    scf.if %5 {
      %c0 = arith.constant 0 : index
      %c0_2 = arith.constant 0 : index
      %6 = vector.load %arg15[%c0, %c0_2] : memref<16x1xf32, #tpu.memory_space<vmem>>, vector<16x1xf32>
      %c0_3 = arith.constant 0 : index
      %c0_4 = arith.constant 0 : index
      %7 = vector.load %arg16[%c0_3, %c0_4] : memref<16x1xf32, #tpu.memory_space<vmem>>, vector<16x1xf32>
      %c0_5 = arith.constant 0 : index
      %c0_6 = arith.constant 0 : index
      %8 = vector.load %arg9[%c0_5, %c0_6] : memref<16x1xf32, #tpu.memory_space<vmem>>, vector<16x1xf32>
      %c0_7 = arith.constant 0 : index
      %c0_8 = arith.constant 0 : index
      %9 = vector.load %arg10[%c0_7, %c0_8] : memref<16x1xf32, #tpu.memory_space<vmem>>, vector<16x1xf32>
      %cst = arith.constant 2.000000e-03 : f32
      %10 = vector.broadcast %cst : f32 to vector<16x1xf32>
      %11 = arith.mulf %6, %10 : vector<16x1xf32>
      %cst_9 = arith.constant 2.000000e-03 : f32
      %12 = vector.broadcast %cst_9 : f32 to vector<16x1xf32>
      %13 = arith.mulf %7, %12 : vector<16x1xf32>
      %14 = arith.mulf %11, %11 : vector<16x1xf32>
      %15 = arith.subf %13, %14 : vector<16x1xf32>
      %cst_10 = arith.constant 9.99999997E-7 : f32
      %16 = vector.broadcast %cst_10 : f32 to vector<16x1xf32>
      %17 = arith.addf %15, %16 : vector<16x1xf32>
      %18 = math.rsqrt %17 : vector<16x1xf32>
      %19 = math.exp %8 : vector<16x1xf32>
      %20 = arith.mulf %18, %19 : vector<16x1xf32>
      %21 = arith.mulf %11, %20 : vector<16x1xf32>
      %22 = arith.subf %9, %21 : vector<16x1xf32>
      %cst_11 = arith.constant 9.99999997E-7 : f32
      %23 = vector.broadcast %cst_11 : f32 to vector<16x1xf32>
      %24 = arith.addf %17, %23 : vector<16x1xf32>
      %25 = math.log %24 : vector<16x1xf32>
      %cst_12 = arith.constant 5.000000e-01 : f32
      %26 = vector.broadcast %cst_12 : f32 to vector<16x1xf32>
      %27 = arith.mulf %26, %25 : vector<16x1xf32>
      %28 = arith.subf %8, %27 : vector<16x1xf32>
      %29 = vector.shape_cast %28 : vector<16x1xf32> to vector<1x16x1xf32>
      %cst_13 = arith.constant dense<0.000000e+00> : vector<1xf32>
      %30 = vector.multi_reduction <add>, %29, %cst_13 [1, 2] : vector<1x16x1xf32> to vector<1xf32>
      %31 = vector.shape_cast %30 : vector<1xf32> to vector<1x1x1xf32>
      %32 = vector.extract %31[0, 0, 0] : f32 from vector<1x1x1xf32>
      %33 = vector.broadcast %32 : f32 to vector<1x1xf32>
      %34 = arith.index_cast %arg1 : i32 to index
      %c0_14 = arith.constant 0 : index
      %c0_15 = arith.constant 0 : index
      %35 = vector.load %arg13[%34, %c0_14, %c0_15] : memref<4x16x128xf32, #tpu.memory_space<vmem>>, vector<1x16x128xf32>
      %36 = vector.shape_cast %35 : vector<1x16x128xf32> to vector<16x128xf32>
      %37 = arith.index_cast %arg1 : i32 to index
      %c0_16 = arith.constant 0 : index
      %c0_17 = arith.constant 0 : index
      %38 = vector.load %arg14[%37, %c0_16, %c0_17] : memref<4x1x128xf32, #tpu.memory_space<vmem>>, vector<1x1x128xf32>
      %39 = vector.shape_cast %38 : vector<1x1x128xf32> to vector<1x128xf32>
      %40 = vector.broadcast %20 : vector<16x1xf32> to vector<16x128xf32>
      %41 = arith.mulf %36, %40 : vector<16x128xf32>
      %42 = vector.broadcast %22 : vector<16x1xf32> to vector<16x128xf32>
      %43 = arith.addf %41, %42 : vector<16x128xf32>
      %c0_18 = arith.constant 0 : index
      %c0_19 = arith.constant 0 : index
      %44 = vector.load %arg12[%c0_18, %c0_19] : memref<16x128xf32, #tpu.memory_space<vmem>>, vector<16x128xf32>
      tpu.vector_store %arg12[%c0_18, %c0_19], %43 {strides = array<i32>} : memref<16x128xf32, #tpu.memory_space<vmem>>, vector<16x128xf32>,
      %45 = vector.broadcast %33 : vector<1x1xf32> to vector<1x128xf32>
      %46 = arith.addf %39, %45 : vector<1x128xf32>
      %c0_20 = arith.constant 0 : index
      %c0_21 = arith.constant 0 : index
      %47 = vector.load %arg11[%c0_20, %c0_21] : memref<1x128xf32, #tpu.memory_space<vmem>>, vector<1x128xf32>
      tpu.vector_store %arg11[%c0_20, %c0_21], %46 {strides = array<i32>} : memref<1x128xf32, #tpu.memory_space<vmem>>, vector<1x128xf32>,
    } else {
    }
    return
  }
  func.func @transform_0(%arg0: i32, %arg1: i32) -> (i32, i32) {
    %c1_i32 = arith.constant 1 : i32
    %0 = arith.subi %c1_i32, %arg0 : i32
    %1 = arith.muli %arg1, %0 : i32
    %c0_i32 = arith.constant 0 : i32
    %c0_i32_0 = arith.constant 0 : i32
    return %c0_i32, %1 : i32, i32
  }
  func.func @transform_1(%arg0: i32, %arg1: i32) -> (i32, i32) {
    %c0_i32 = arith.constant 0 : i32
    %c0_i32_0 = arith.constant 0 : i32
    %c0_i32_1 = arith.constant 0 : i32
    return %c0_i32, %c0_i32_0 : i32, i32
  }
  func.func @transform_2(%arg0: i32, %arg1: i32) -> (i32, i32) {
    %c0_i32 = arith.constant 0 : i32
    %c0_i32_0 = arith.constant 0 : i32
    %c0_i32_1 = arith.constant 0 : i32
    return %c0_i32, %c0_i32_0 : i32, i32
  }
  func.func @transform_3(%arg0: i32, %arg1: i32) -> (i32, i32) {
    %c0_i32 = arith.constant 0 : i32
    %c0_i32_0 = arith.constant 0 : i32
    %c0_i32_1 = arith.constant 0 : i32
    return %c0_i32, %c0_i32_0 : i32, i32
  }
  func.func @transform_4(%arg0: i32, %arg1: i32) -> (i32, i32) {
    %c0_i32 = arith.constant 0 : i32
    %c0_i32_0 = arith.constant 0 : i32
    %c0_i32_1 = arith.constant 0 : i32
    return %c0_i32, %c0_i32_0 : i32, i32
  }
  func.func @transform_5(%arg0: i32, %arg1: i32) -> (i32, i32) {
    %c0_i32 = arith.constant 0 : i32
    %c0_i32_0 = arith.constant 0 : i32
    %c0_i32_1 = arith.constant 0 : i32
    return %c0_i32, %c0_i32_0 : i32, i32
  }
  func.func @transform_6(%arg0: i32, %arg1: i32) -> (i32, i32) {
    %c0_i32 = arith.constant 0 : i32
    %c0_i32_0 = arith.constant 0 : i32
    %c0_i32_1 = arith.constant 0 : i32
    return %c0_i32, %c0_i32_0 : i32, i32
  }
  func.func @transform_7(%arg0: i32, %arg1: i32) -> (i32, i32) {
    %c0_i32 = arith.constant 0 : i32
    %c0_i32_0 = arith.constant 0 : i32
    %c0_i32_1 = arith.constant 0 : i32
    return %c0_i32, %c0_i32_0 : i32, i32
  }
  func.func @transform_8(%arg0: i32, %arg1: i32) -> (i32, i32) {
    %c0_i32 = arith.constant 0 : i32
    %c0_i32_0 = arith.constant 0 : i32
    %c0_i32_1 = arith.constant 0 : i32
    return %c0_i32, %c0_i32_0 : i32, i32
  }
  func.func @transform_9(%arg0: i32, %arg1: i32) -> (i32, i32) {
    %0 = arith.muli %arg1, %arg0 : i32
    %c0_i32 = arith.constant 0 : i32
    %c0_i32_0 = arith.constant 0 : i32
    return %c0_i32, %0 : i32, i32
  }
  func.func @transform_10(%arg0: i32, %arg1: i32) -> (i32, i32) {
    %0 = arith.muli %arg1, %arg0 : i32
    %c0_i32 = arith.constant 0 : i32
    %c0_i32_0 = arith.constant 0 : i32
    return %c0_i32, %0 : i32, i32
  }
}

</mosaic_0001>

<llo_original>
// kernel: tpu_custom_call.1
$region0: #{tpu_custom_call.1}
  #allocation0 [shape = 'u32[]', space=smem, size = 0x4, offset = 0x4, fixed_abs, tag = 'smem constant byte address 0x4 - core index']
  #allocation1 [shape = 'u32[144,128]{1,0:T(1,128)}', space=vmem, size = 0x12000, scoped, tag = 'internal scratch']
  #allocation2 [shape = 'f32[4,16,128]{2,1,0:T(8,128)}', space=vmem, size = 0x8000, scoped, tag = 'scratch operand']
  #allocation3 [shape = 'f32[4,1,128]{2,1,0:T(1,128)}', space=vmem, size = 0x800, scoped, tag = 'scratch operand']
  #allocation4 [shape = 'f32[16,1]{1,0:T(8,128)}', space=vmem, size = 0x2000, scoped, tag = 'scratch operand']
  #allocation5 [shape = 'f32[16,1]{1,0:T(8,128)}', space=vmem, size = 0x2000, scoped, tag = 'scratch operand']
  %s0 = inlined_call_operand.vmem [shape: f32[16,512], index: 0, kind: input, shape index: {}]
  %s1 = inlined_call_operand.vmem [shape: bf16[32,16], index: 1, kind: input, shape index: {}]
  %s2 = inlined_call_operand.vmem [shape: f32[32,1], index: 2, kind: input, shape index: {}]
  %s3 = inlined_call_operand.vmem [shape: bf16[32,32], index: 3, kind: input, shape index: {}]
  %s4 = inlined_call_operand.vmem [shape: f32[32,1], index: 4, kind: input, shape index: {}]
  %s5 = inlined_call_operand.vmem [shape: bf16[32,32], index: 5, kind: input, shape index: {}]
  %s6 = inlined_call_operand.vmem [shape: f32[32,1], index: 6, kind: input, shape index: {}]
  %s7 = inlined_call_operand.vmem [shape: f32[16,1], index: 7, kind: input, shape index: {}]
  %s8 = inlined_call_operand.vmem [shape: f32[16,1], index: 8, kind: input, shape index: {}]
  %s9 = inlined_call_operand.hbm [shape: f32[1,512], index: 9, kind: output, shape index: {0}]
  %s10 = inlined_call_operand.hbm [shape: f32[16,512], index: 10, kind: output, shape index: {1}]
  %11 = xla_tuple %s9, %s10
  %s12 = sld [smem:[#allocation0]]
  $region127: #{tpu_custom_call.1} parent=0
    _
  %s14 = ssub.s32 1, %s12
  %s15 = scalar_select 0, %s14, %s12
  $region1: #{tpu_custom_call.1} parent=0
    #allocation6 [shape = 'u8[16384]{0}', space=vmem, size = 0x4000, scoped, tag = 'input window, operand 0']
    #allocation7 [shape = 'u8[1024]{0}', space=vmem, size = 0x400, scoped, tag = 'output window, operand 0']
    #allocation8 [shape = 's32[2]{0}', space=sflag, size = 0x8, scoped, tag = 'scoped memory for tpu_custom_call.1']
    #allocation9 [shape = 'u8[16384]{0}', space=vmem, size = 0x4000, scoped, tag = 'output window, operand 1']
    #allocation10 [shape = 's32[2]{0}', space=sflag, size = 0x8, scoped, tag = 'scoped memory for tpu_custom_call.1']
    %16 = vsyncpa [#allocation8], 0
    %s17 = scalar_lea.sflag [#allocation8], 1
    %18 = vsyncpa %s17, 0
    %19 = vsyncpa [#allocation10], 0
    %s20 = scalar_lea.sflag [#allocation10], 1
    %21 = vsyncpa %s20, 0
    loop: start=0, step=1, limit=10
    $region2: #{tpu_custom_call.1} parent=1 // loop_pre_header
      _
    $region3: #{tpu_custom_call.1} parent=1 // loop_header
      %s23 = sphi 0, %s27
      %p24 = scmp.ge.s32.totalorder %s23, 10
      %s30 = sphi 0, %s42
      %s31 = sphi 0, %s38
      %s32 = sphi 0, %s30
      %s33 = sphi 0, %s31
      %s34 = sphi 0, %s32
      %s35 = sphi 0, %s33
      %s49 = sphi 0, %s51
      %s52 = sphi 0, %s49
      %s53 = sphi 0, %s52
      %s69 = sphi 0, %s53
      %s73 = sphi 0, %s73
      %s75 = sphi 0, %s73
      %s76 = sphi 0, %s75
      %s90 = sphi 0, %s76
      %s94 = sphi 0, %s94
      %s96 = sphi 0, %s94
      %s97 = sphi 0, %s96
      %s111 = sphi 0, %s97
      %s115 = sphi 0, %s115
      %s117 = sphi 0, %s115
      %s118 = sphi 0, %s117
      %s132 = sphi 0, %s118
      %s136 = sphi 0, %s136
      %s138 = sphi 0, %s136
      %s139 = sphi 0, %s138
      %s153 = sphi 0, %s139
      %s157 = sphi 0, %s157
      %s159 = sphi 0, %s157
      %s160 = sphi 0, %s159
      %s174 = sphi 0, %s160
      %s178 = sphi 0, %s178
      %s180 = sphi 0, %s178
      %s181 = sphi 0, %s180
      %s195 = sphi 0, %s181
      %s199 = sphi 0, %s199
      %s201 = sphi 0, %s199
      %s202 = sphi 0, %s201
      %s216 = sphi 0, %s202
      %s220 = sphi 0, %s220
      %s222 = sphi 0, %s220
      %s223 = sphi 0, %s222
      %s237 = sphi 0, %s223
      %s245 = sphi 0, %s247
      %s248 = sphi 0, %s245
      %s249 = sphi 0, %s248
      %s265 = sphi 0, %s249
      %s273 = sphi 0, %s275
      %s276 = sphi 0, %s273
      %s277 = sphi 0, %s276
      %s293 = sphi 0, %s277
    $region4: #{tpu_custom_call.1} parent=1 // loop_header_branch
      %26 = sbr.rel (%p24) target = $region8
    $region5: #{tpu_custom_call.1} parent=1 // loop_body
      %s28 = ssub.s32 %s23, 1
      %s29 = ssub.s32 %s23, 2
      %s36 = sadd.s32 1, %s31
      %p37 = scmp.ge.s32.totalorder %s36, 4
      %s38 = scalar_select %p37, 0, %s36
      %s39 = sadd.s32 1, %s30
      %s40 = scalar_select %p37, %s39, %s30
      %p41 = scmp.ge.s32.totalorder %s40, 2
      %s42 = scalar_select %p41, 0, %s40
      %s43 = ssub.s32 1, %s30
      %s44 = smul.u32 %s31, %s43
      %s45 = ssub.s32 1, %s42
      %s46 = smul.u32 %s38, %s45
      %s47 = ssub.s32 %s44, %s46
      %p48 = scmp.eq.s32.totalorder %s47, 0
      %s50 = sadd.s32 %s49, 1
      %s51 = scalar_select %p48, %s49, %s50
      %p54 = pneg %p48
      %p55 = scmp.eq.s32.totalorder %s23, 7
      %p56 = por %p54, %p55
      %p57 = scmp.ne.s32.totalorder %s49, %s52
      %p58 = scmp.eq.s32.totalorder %s23, 0
      %p59 = por %p57, %p58
      %p60 = scmp.ne.s32.totalorder %s49, %s52
      %p61 = scmp.eq.s32.totalorder %s28, 7
      %p62 = por %p60, %p61
      %p63 = scmp.ne.s32.totalorder %s52, %s53
      %p64 = scmp.eq.s32.totalorder %s28, 0
      %p65 = por %p63, %p64
      %p66 = scmp.ne.s32.totalorder %s52, %s53
      %p67 = scmp.eq.s32.totalorder %s29, 7
      %p68 = por %p66, %p67
      %p70 = scmp.ne.s32.totalorder %s53, %s69
      %p71 = scmp.eq.s32.totalorder %s29, 0
      %p72 = por %p70, %p71
      %s74 = sadd.s32 %s73, 1
      %p77 = scmp.eq.s32.totalorder %s23, 7
      %p78 = scmp.ne.s32.totalorder %s73, %s75
      %p79 = scmp.eq.s32.totalorder %s23, 0
      %p80 = por %p78, %p79
      %p81 = scmp.ne.s32.totalorder %s73, %s75
      %p82 = scmp.eq.s32.totalorder %s28, 7
      %p83 = por %p81, %p82
      %p84 = scmp.ne.s32.totalorder %s75, %s76
      %p85 = scmp.eq.s32.totalorder %s28, 0
      %p86 = por %p84, %p85
      %p87 = scmp.ne.s32.totalorder %s75, %s76
      %p88 = scmp.eq.s32.totalorder %s29, 7
      %p89 = por %p87, %p88
      %p91 = scmp.ne.s32.totalorder %s76, %s90
      %p92 = scmp.eq.s32.totalorder %s29, 0
      %p93 = por %p91, %p92
      %s95 = sadd.s32 %s94, 1
      %p98 = scmp.eq.s32.totalorder %s23, 7
      %p99 = scmp.ne.s32.totalorder %s94, %s96
      %p100 = scmp.eq.s32.totalorder %s23, 0
      %p101 = por %p99, %p100
      %p102 = scmp.ne.s32.totalorder %s94, %s96
      %p103 = scmp.eq.s32.totalorder %s28, 7
      %p104 = por %p102, %p103
      %p105 = scmp.ne.s32.totalorder %s96, %s97
      %p106 = scmp.eq.s32.totalorder %s28, 0
      %p107 = por %p105, %p106
      %p108 = scmp.ne.s32.totalorder %s96, %s97
      %p109 = scmp.eq.s32.totalorder %s29, 7
      %p110 = por %p108, %p109
      %p112 = scmp.ne.s32.totalorder %s97, %s111
      %p113 = scmp.eq.s32.totalorder %s29, 0
      %p114 = por %p112, %p113
      %s116 = sadd.s32 %s115, 1
      %p119 = scmp.eq.s32.totalorder %s23, 7
      %p120 = scmp.ne.s32.totalorder %s115, %s117
      %p121 = scmp.eq.s32.totalorder %s23, 0
      %p122 = por %p120, %p121
      %p123 = scmp.ne.s32.totalorder %s115, %s117
      %p124 = scmp.eq.s32.totalorder %s28, 7
      %p125 = por %p123, %p124
      %p126 = scmp.ne.s32.totalorder %s117, %s118
      %p127 = scmp.eq.s32.totalorder %s28, 0
      %p128 = por %p126, %p127
      %p129 = scmp.ne.s32.totalorder %s117, %s118
      %p130 = scmp.eq.s32.totalorder %s29, 7
      %p131 = por %p129, %p130
      %p133 = scmp.ne.s32.totalorder %s118, %s132
      %p134 = scmp.eq.s32.totalorder %s29, 0
      %p135 = por %p133, %p134
      %s137 = sadd.s32 %s136, 1
      %p140 = scmp.eq.s32.totalorder %s23, 7
      %p141 = scmp.ne.s32.totalorder %s136, %s138
      %p142 = scmp.eq.s32.totalorder %s23, 0
      %p143 = por %p141, %p142
      %p144 = scmp.ne.s32.totalorder %s136, %s138
      %p145 = scmp.eq.s32.totalorder %s28, 7
      %p146 = por %p144, %p145
      %p147 = scmp.ne.s32.totalorder %s138, %s139
      %p148 = scmp.eq.s32.totalorder %s28, 0
      %p149 = por %p147, %p148
      %p150 = scmp.ne.s32.totalorder %s138, %s139
      %p151 = scmp.eq.s32.totalorder %s29, 7
      %p152 = por %p150, %p151
      %p154 = scmp.ne.s32.totalorder %s139, %s153
      %p155 = scmp.eq.s32.totalorder %s29, 0
      %p156 = por %p154, %p155
      %s158 = sadd.s32 %s157, 1
      %p161 = scmp.eq.s32.totalorder %s23, 7
      %p162 = scmp.ne.s32.totalorder %s157, %s159
      %p163 = scmp.eq.s32.totalorder %s23, 0
      %p164 = por %p162, %p163
      %p165 = scmp.ne.s32.totalorder %s157, %s159
      %p166 = scmp.eq.s32.totalorder %s28, 7
      %p167 = por %p165, %p166
      %p168 = scmp.ne.s32.totalorder %s159, %s160
      %p169 = scmp.eq.s32.totalorder %s28, 0
      %p170 = por %p168, %p169
      %p171 = scmp.ne.s32.totalorder %s159, %s160
      %p172 = scmp.eq.s32.totalorder %s29, 7
      %p173 = por %p171, %p172
      %p175 = scmp.ne.s32.totalorder %s160, %s174
      %p176 = scmp.eq.s32.totalorder %s29, 0
      %p177 = por %p175, %p176
      %s179 = sadd.s32 %s178, 1
      %p182 = scmp.eq.s32.totalorder %s23, 7
      %p183 = scmp.ne.s32.totalorder %s178, %s180
      %p184 = scmp.eq.s32.totalorder %s23, 0
      %p185 = por %p183, %p184
      %p186 = scmp.ne.s32.totalorder %s178, %s180
      %p187 = scmp.eq.s32.totalorder %s28, 7
      %p188 = por %p186, %p187
      %p189 = scmp.ne.s32.totalorder %s180, %s181
      %p190 = scmp.eq.s32.totalorder %s28, 0
      %p191 = por %p189, %p190
      %p192 = scmp.ne.s32.totalorder %s180, %s181
      %p193 = scmp.eq.s32.totalorder %s29, 7
      %p194 = por %p192, %p193
      %p196 = scmp.ne.s32.totalorder %s181, %s195
      %p197 = scmp.eq.s32.totalorder %s29, 0
      %p198 = por %p196, %p197
      %s200 = sadd.s32 %s199, 1
      %p203 = scmp.eq.s32.totalorder %s23, 7
      %p204 = scmp.ne.s32.totalorder %s199, %s201
      %p205 = scmp.eq.s32.totalorder %s23, 0
      %p206 = por %p204, %p205
      %p207 = scmp.ne.s32.totalorder %s199, %s201
      %p208 = scmp.eq.s32.totalorder %s28, 7
      %p209 = por %p207, %p208
      %p210 = scmp.ne.s32.totalorder %s201, %s202
      %p211 = scmp.eq.s32.totalorder %s28, 0
      %p212 = por %p210, %p211
      %p213 = scmp.ne.s32.totalorder %s201, %s202
      %p214 = scmp.eq.s32.totalorder %s29, 7
      %p215 = por %p213, %p214
      %p217 = scmp.ne.s32.totalorder %s202, %s216
      %p218 = scmp.eq.s32.totalorder %s29, 0
      %p219 = por %p217, %p218
      %s221 = sadd.s32 %s220, 1
      %p224 = scmp.eq.s32.totalorder %s23, 7
      %p225 = scmp.ne.s32.totalorder %s220, %s222
      %p226 = scmp.eq.s32.totalorder %s23, 0
      %p227 = por %p225, %p226
      %p228 = scmp.ne.s32.totalorder %s220, %s222
      %p229 = scmp.eq.s32.totalorder %s28, 7
      %p230 = por %p228, %p229
      %p231 = scmp.ne.s32.totalorder %s222, %s223
      %p232 = scmp.eq.s32.totalorder %s28, 0
      %p233 = por %p231, %p232
      %p234 = scmp.ne.s32.totalorder %s222, %s223
      %p235 = scmp.eq.s32.totalorder %s29, 7
      %p236 = por %p234, %p235
      %p238 = scmp.ne.s32.totalorder %s223, %s237
      %p239 = scmp.eq.s32.totalorder %s29, 0
      %p240 = por %p238, %p239
      %s241 = smul.u32 %s31, %s30
      %s242 = smul.u32 %s38, %s42
      %s243 = ssub.s32 %s241, %s242
      %p244 = scmp.eq.s32.totalorder %s243, 0
      %s246 = sadd.s32 %s245, 1
      %s247 = scalar_select %p244, %s245, %s246
      %p250 = pneg %p244
      %p251 = scmp.eq.s32.totalorder %s23, 7
      %p252 = por %p250, %p251
      %p253 = scmp.ne.s32.totalorder %s245, %s248
      %p254 = scmp.eq.s32.totalorder %s23, 0
      %p255 = por %p253, %p254
      %p256 = scmp.ne.s32.totalorder %s245, %s248
      %p257 = scmp.eq.s32.totalorder %s28, 7
      %p258 = por %p256, %p257
      %p259 = scmp.ne.s32.totalorder %s248, %s249
      %p260 = scmp.eq.s32.totalorder %s28, 0
      %p261 = por %p259, %p260
      %p262 = scmp.ne.s32.totalorder %s248, %s249
      %p263 = scmp.eq.s32.totalorder %s29, 7
      %p264 = por %p262, %p263
      %p266 = scmp.ne.s32.totalorder %s249, %s265
      %p267 = scmp.eq.s32.totalorder %s29, 0
      %p268 = por %p266, %p267
      %s269 = smul.u32 %s31, %s30
      %s270 = smul.u32 %s38, %s42
      %s271 = ssub.s32 %s269, %s270
      %p272 = scmp.eq.s32.totalorder %s271, 0
      %s274 = sadd.s32 %s273, 1
      %s275 = scalar_select %p272, %s273, %s274
      %p278 = pneg %p272
      %p279 = scmp.eq.s32.totalorder %s23, 7
      %p280 = por %p278, %p279
      %p281 = scmp.ne.s32.totalorder %s273, %s276
      %p282 = scmp.eq.s32.totalorder %s23, 0
      %p283 = por %p281, %p282
      %p284 = scmp.ne.s32.totalorder %s273, %s276
      %p285 = scmp.eq.s32.totalorder %s28, 7
      %p286 = por %p284, %p285
      %p287 = scmp.ne.s32.totalorder %s276, %s277
      %p288 = scmp.eq.s32.totalorder %s28, 0
      %p289 = por %p287, %p288
      %p290 = scmp.ne.s32.totalorder %s276, %s277
      %p291 = scmp.eq.s32.totalorder %s29, 7
      %p292 = por %p290, %p291
      %p294 = scmp.ne.s32.totalorder %s277, %s293
      %p295 = scmp.eq.s32.totalorder %s29, 0
      %p296 = por %p294, %p295
      %p297 = scmp.le.s32.totalorder 1, %s23
      %p298 = scmp.lt.s32.totalorder %s23, 9
      %p299 = pnand %p297, %p298
      %p300 = pneg %p299
      // Predicated region
      $region9: #{tpu_custom_call.1} parent=5 // pred_check
        _
      $region10: #{tpu_custom_call.1} parent=5 // pred_check_branch
        %302 = sbr.rel (%p299) target = $region12
      $region11: #{tpu_custom_call.1} parent=5 // pred_region
        %s303 = ssub.s32 %s23, 1
        // Predicated region
        $region13: #{tpu_custom_call.1} parent=11 // pred_check
          %p304 = pneg %p86
        $region14: #{tpu_custom_call.1} parent=11 // pred_check_branch
          %306 = sbr.rel (%p304) target = $region16
        $region15: #{tpu_custom_call.1} parent=11 // pred_region
          _
        $region16: #{tpu_custom_call.1} parent=11 // pred_fallthru
          _
        // Predicated region
        $region17: #{tpu_custom_call.1} parent=11 // pred_check
          %p307 = pneg %p107
        $region18: #{tpu_custom_call.1} parent=11 // pred_check_branch
          %309 = sbr.rel (%p307) target = $region20
        $region19: #{tpu_custom_call.1} parent=11 // pred_region
          _
        $region20: #{tpu_custom_call.1} parent=11 // pred_fallthru
          _
        // Predicated region
        $region21: #{tpu_custom_call.1} parent=11 // pred_check
          %p310 = pneg %p128
        $region22: #{tpu_custom_call.1} parent=11 // pred_check_branch
          %312 = sbr.rel (%p310) target = $region24
        $region23: #{tpu_custom_call.1} parent=11 // pred_region
          _
        $region24: #{tpu_custom_call.1} parent=11 // pred_fallthru
          _
        // Predicated region
        $region25: #{tpu_custom_call.1} parent=11 // pred_check
          %p313 = pneg %p149
        $region26: #{tpu_custom_call.1} parent=11 // pred_check_branch
          %315 = sbr.rel (%p313) target = $region28
        $region27: #{tpu_custom_call.1} parent=11 // pred_region
          _
        $region28: #{tpu_custom_call.1} parent=11 // pred_fallthru
          _
        // Predicated region
        $region29: #{tpu_custom_call.1} parent=11 // pred_check
          %p316 = pneg %p170
        $region30: #{tpu_custom_call.1} parent=11 // pred_check_branch
          %318 = sbr.rel (%p316) target = $region32
        $region31: #{tpu_custom_call.1} parent=11 // pred_region
          _
        $region32: #{tpu_custom_call.1} parent=11 // pred_fallthru
          _
        // Predicated region
        $region33: #{tpu_custom_call.1} parent=11 // pred_check
          %p319 = pneg %p191
        $region34: #{tpu_custom_call.1} parent=11 // pred_check_branch
          %321 = sbr.rel (%p319) target = $region36
        $region35: #{tpu_custom_call.1} parent=11 // pred_region
          _
        $region36: #{tpu_custom_call.1} parent=11 // pred_fallthru
          _
        // Predicated region
        $region37: #{tpu_custom_call.1} parent=11 // pred_check
          %p322 = pneg %p212
        $region38: #{tpu_custom_call.1} parent=11 // pred_check_branch
          %324 = sbr.rel (%p322) target = $region40
        $region39: #{tpu_custom_call.1} parent=11 // pred_region
          _
        $region40: #{tpu_custom_call.1} parent=11 // pred_fallthru
          _
        // Predicated region
        $region41: #{tpu_custom_call.1} parent=11 // pred_check
          %p325 = pneg %p233
        $region42: #{tpu_custom_call.1} parent=11 // pred_check_branch
          %327 = sbr.rel (%p325) target = $region44
        $region43: #{tpu_custom_call.1} parent=11 // pred_region
          _
        $region44: #{tpu_custom_call.1} parent=11 // pred_fallthru
          _
      $region12: #{tpu_custom_call.1} parent=5 // pred_fallthru
        _
      %p328 = scmp.lt.s32.totalorder %s23, 8
      // Predicated region
      $region45: #{tpu_custom_call.1} parent=5 // pred_check
        %p329 = pneg %p328
      $region46: #{tpu_custom_call.1} parent=5 // pred_check_branch
        %331 = sbr.rel (%p329) target = $region48
      $region47: #{tpu_custom_call.1} parent=5 // pred_region
        // Predicated region
        $region49: #{tpu_custom_call.1} parent=47 // pred_check
          %p332 = pneg %p59
        $region50: #{tpu_custom_call.1} parent=47 // pred_check_branch
          %334 = sbr.rel (%p332) target = $region52
        $region51: #{tpu_custom_call.1} parent=47 // pred_region
          %s335 = sand.u32 %s49, 1
          %s336 = sand.u32 %s49, 1
          %s337 = smul.addr %s336, 16
          %s338 = scalar_lea.vmem [#allocation6], %s337
          %s339 = ssub.s32 1, %s30
          %s340 = smul.u32 %s31, %s339
          %s341 = smul.addr %s340, 8
          %s342 = scalar_lea.vmem %s0, %s341
          // Predicated region
          $region53: #{tpu_custom_call.1} parent=51 // pred_check
            _
          $region54: #{tpu_custom_call.1} parent=51 // pred_check_branch
            %344 = sbr.rel (0) target = $region56
          $region55: #{tpu_custom_call.1} parent=51 // pred_region
            // Predicated region
            $region57: #{tpu_custom_call.1} parent=55 // pred_check
              _
            $region58: #{tpu_custom_call.1} parent=55 // pred_check_branch
              %346 = sbr.rel (0) target = $region60
            $region59: #{tpu_custom_call.1} parent=55 // pred_region
              // Predicated region
              $region72: #{tpu_custom_call.1} parent=59 // pred_check
                _
              $region73: #{tpu_custom_call.1} parent=59 // pred_check_branch
                %363 = sbr.rel (0) target = $region75
              $region74: #{tpu_custom_call.1} parent=59 // pred_region
                loop: start=0, step=1, limit=1
                $region76: #{tpu_custom_call.1} parent=74 // loop_pre_header
                  _
                $region77: #{tpu_custom_call.1} parent=74 // loop_header
                  %s365 = sphi 0, %s369
                  %p366 = scmp.ge.s32.totalorder %s365, 1
                  %s370 = sphi %s342, %s342
                  %s371 = sphi %s338, %s338
                $region78: #{tpu_custom_call.1} parent=74 // loop_header_branch
                  %368 = sbr.rel (%p366) target = $region82
                $region79: #{tpu_custom_call.1} parent=74 // loop_body
                  %v372 = vld [vmem:[%s370] sm:$0xff]
                  %373 = vst [vmem:[%s371] sm:$0xff] %v372
                  %v374 = vld [vmem:[%s370 + $0x20] sm:$0xff]
                  %375 = vst [vmem:[%s371 + $0x8] sm:$0xff] %v374
                $region80: #{tpu_custom_call.1} parent=74 // loop_footer
                  %s369 = sadd.s32 1, %s365
                $region81: #{tpu_custom_call.1} parent=74 // loop_footer_branch
                  %364 = sbr.rel target = $region77
                $region82: #{tpu_custom_call.1} parent=74 // loop_exit
                  _
              $region75: #{tpu_custom_call.1} parent=59 // pred_fallthru
                _
              // Predicated region
              $region83: #{tpu_custom_call.1} parent=59 // pred_check
                _
              $region84: #{tpu_custom_call.1} parent=59 // pred_check_branch
                %377 = sbr.rel target = $region86
              $region85: #{tpu_custom_call.1} parent=59 // pred_region
                _
              $region86: #{tpu_custom_call.1} parent=59 // pred_fallthru
                _
            $region60: #{tpu_custom_call.1} parent=55 // pred_fallthru
              _
            // Predicated region
            $region61: #{tpu_custom_call.1} parent=55 // pred_check
              _
            $region62: #{tpu_custom_call.1} parent=55 // pred_check_branch
              %348 = sbr.rel target = $region64
            $region63: #{tpu_custom_call.1} parent=55 // pred_region
              loop: start=0, step=1, limit=1
              $region65: #{tpu_custom_call.1} parent=63 // loop_pre_header
                _
              $region66: #{tpu_custom_call.1} parent=63 // loop_header
                %s351 = sphi 0, %s355
                %p352 = scmp.ge.s32.totalorder %s351, 1
                %s356 = sphi %s342, %s342
                %s357 = sphi %s338, %s338
              $region67: #{tpu_custom_call.1} parent=63 // loop_header_branch
                %354 = sbr.rel (%p352) target = $region71
              $region68: #{tpu_custom_call.1} parent=63 // loop_body
                %v358 = vld [vmem:[%s356] sm:$0xff]
                %359 = vst [vmem:[%s357] sm:$0xff] %v358
                %v360 = vld [vmem:[%s356 + $0x20] sm:$0xff]
                %361 = vst [vmem:[%s357 + $0x8] sm:$0xff] %v360
              $region69: #{tpu_custom_call.1} parent=63 // loop_footer
                %s355 = sadd.s32 1, %s351
              $region70: #{tpu_custom_call.1} parent=63 // loop_footer_branch
                %350 = sbr.rel target = $region66
              $region71: #{tpu_custom_call.1} parent=63 // loop_exit
                _
            $region64: #{tpu_custom_call.1} parent=55 // pred_fallthru
              _
          $region56: #{tpu_custom_call.1} parent=51 // pred_fallthru
            _
          %378 = vnop
        $region52: #{tpu_custom_call.1} parent=47 // pred_fallthru
          _
      $region48: #{tpu_custom_call.1} parent=5 // pred_fallthru
        _
      %p379 = scmp.le.s32.totalorder 1, %s23
      %p380 = scmp.lt.s32.totalorder %s23, 9
      %p381 = pnand %p379, %p380
      %p382 = pneg %p381
      // Predicated region
      $region87: #{tpu_custom_call.1} parent=5 // pred_check
        _
      $region88: #{tpu_custom_call.1} parent=5 // pred_check_branch
        %384 = sbr.rel (%p381) target = $region90
      $region89: #{tpu_custom_call.1} parent=5 // pred_region
        %s385 = ssub.s32 %s23, 1
        %s386 = sand.u32 %s52, 1
        %s387 = sand.u32 %s52, 1
        %s388 = smul.addr %s387, 16
        %s389 = scalar_lea.vmem [#allocation6], %s388
        // Predicated region
        $region91: #{tpu_custom_call.1} parent=89 // pred_check
          %p390 = pneg %p65
        $region92: #{tpu_custom_call.1} parent=89 // pred_check_branch
          %392 = sbr.rel (%p390) target = $region94
        $region93: #{tpu_custom_call.1} parent=89 // pred_region
          _
        $region94: #{tpu_custom_call.1} parent=89 // pred_fallthru
          _
        %s393 = sand.u32 %s52, 1
        %s394 = sand.u32 %s52, 1
        %s395 = smul.addr %s394, 16
        %s396 = scalar_lea.vmem [#allocation6], %s395
        %p397 = pneg %p65
        %p398 = pneg %p62
        %p399 = pneg %p86
        %p400 = pneg %p83
        %p401 = pneg %p107
        %p402 = pneg %p104
        %p403 = pneg %p128
        %p404 = pneg %p125
        %p405 = pneg %p149
        %p406 = pneg %p146
        %p407 = pneg %p170
        %p408 = pneg %p167
        %p409 = pneg %p191
        %p410 = pneg %p188
        %p411 = pneg %p212
        %p412 = pneg %p209
        %p413 = pneg %p233
        %p414 = pneg %p230
        %p415 = pneg %p261
        %p416 = pneg %p258
        %s417 = sand.u32 %s248, 1
        %s418 = scalar_lea.sflag [#allocation8], %s417
        %s419 = sand.u32 %s248, 1
        %s420 = scalar_lea.vmem [#allocation7], %s419
        %p421 = pneg %p289
        %p422 = pneg %p286
        %s423 = sand.u32 %s276, 1
        %s424 = scalar_lea.sflag [#allocation10], %s423
        %s425 = sand.u32 %s276, 1
        %s426 = smul.addr %s425, 16
        %s427 = scalar_lea.vmem [#allocation9], %s426
        %s428 = ssub.s32 1, %s32
        %s429 = smul.u32 %s33, %s428
        %s430 = smul.u32 %s33, %s32
        %s431 = smul.u32 %s33, %s32
        %p433 = scmp.eq.s32.totalorder %s32, 0
        // Predicated region
        $region95: #{tpu_custom_call.1} parent=89 // pred_check
          %p434 = pneg %p433
        $region96: #{tpu_custom_call.1} parent=89 // pred_check_branch
          %436 = sbr.rel (%p434) target = $region98
        $region97: #{tpu_custom_call.1} parent=89 // pred_region
          %p437 = scmp.eq.s32.totalorder %s33, 0
          // Predicated region
          $region99: #{tpu_custom_call.1} parent=97 // pred_check
            %p438 = pneg %p437
          $region100: #{tpu_custom_call.1} parent=97 // pred_check_branch
            %440 = sbr.rel (%p438) target = $region102
          $region101: #{tpu_custom_call.1} parent=97 // pred_region
            %vm441 = vcmask 7168
            %442 = vst.msk [vmem:[#allocation4] sm:$0xff] %vm441, 0.0
            %443 = vst.msk [vmem:[#allocation4 + $0x8] sm:$0xff] %vm441, 0.0
            %444 = vst.msk [vmem:[#allocation5] sm:$0xff] %vm441, 0.0
            %445 = vst.msk [vmem:[#allocation5 + $0x8] sm:$0xff] %vm441, 0.0
          $region102: #{tpu_custom_call.1} parent=97 // pred_fallthru
            _
          %v446 = vld [vmem:[%s389] sm:$0xff]
          %v447 = vld [vmem:[%s389 + $0x8] sm:$0xff]
          %v448 = vld [vmem:[%s1] sm:$0xf]
          %v449 = vld [vmem:[%s1 + $0x4] sm:$0xf]
          %v450 = vld [vmem:[%s1 + $0x8] sm:$0xf]
          %v451 = vld [vmem:[%s1 + $0xc] sm:$0xf]
          %v452 = vld [vmem:[%s2] sm:$0xff]
          %v453 = vld [vmem:[%s2 + $0x8] sm:$0xff]
          %v454 = vld [vmem:[%s2 + $0x10] sm:$0xff]
          %v455 = vld [vmem:[%s2 + $0x18] sm:$0xff]
          %v456 = vld [vmem:[%s3] sm:$0xf]
          %v457 = vld [vmem:[%s3 + $0x4] sm:$0xf]
          %v458 = vld [vmem:[%s3 + $0x8] sm:$0xf]
          %v459 = vld [vmem:[%s3 + $0xc] sm:$0xf]
          %v460 = vld [vmem:[%s4] sm:$0xff]
          %v461 = vld [vmem:[%s4 + $0x8] sm:$0xff]
          %v462 = vld [vmem:[%s4 + $0x10] sm:$0xff]
          %v463 = vld [vmem:[%s4 + $0x18] sm:$0xff]
          %v464 = vld [vmem:[%s5] sm:$0xf]
          %v465 = vld [vmem:[%s5 + $0x4] sm:$0xf]
          %v466 = vld [vmem:[%s5 + $0x8] sm:$0xf]
          %v467 = vld [vmem:[%s5 + $0xc] sm:$0xf]
          %v468 = vld [vmem:[%s6] sm:$0xff]
          %v469 = vld [vmem:[%s6 + $0x8] sm:$0xff]
          %v470 = vld [vmem:[%s6 + $0x10] sm:$0xff]
          %v471 = vld [vmem:[%s6 + $0x18] sm:$0xff]
          %v472 = vpack.c.bf16 %v447, %v446
          %474 = vset.pattern.permute.xlu0 0
          %475 = vperm.xlu0 %474, %v452
          %v476 = vpop.permute.xlu0 %475
          %479 = vset.pattern.permute.xlu0 0
          %480 = vperm.xlu0 %479, %v453
          %v481 = vpop.permute.xlu0 %480
          %484 = vset.pattern.permute.xlu0 0
          %485 = vperm.xlu0 %484, %v454
          %v486 = vpop.permute.xlu0 %485
          %489 = vset.pattern.permute.xlu0 0
          %490 = vperm.xlu0 %489, %v455
          %v491 = vpop.permute.xlu0 %490
          %v497 = vunpack.c.l.b16 %v448
          %v498 = vunpack.c.l.b16 %v449
          %v499 = vunpack.c.l.b16 %v450
          %v500 = vunpack.c.l.b16 %v451
          %v501 = vpack.c.b16 %v498, %v497
          %v502 = vpack.c.b16 %v500, %v499
          %vm503 = vcmask 130048
          %v505 = vsel %vm503, %v501, 0
          %v508 = vsel %vm503, %v502, 0
          %510 = vmatprep.subr.bf16.mxu0 0
          %511 = vmatpush1.bf16.msra.mxu0 %v472
          %512 = vmatprep.subr.bf16.mxu0 0
          %513 = vmatpush1.bf16.msra.mxu0 0
          %514 = vmatprep.subr.bf16.mxu0 0
          %515 = vmatpush1.bf16.msra.mxu0 0
          %516 = vmatprep.subr.bf16.mxu0 0
          %517 = vmatpush1.bf16.msra.mxu0 0
          %518 = vmatprep.subr.bf16.mxu0 0
          %519 = vmatpush1.bf16.msra.mxu0 0
          %520 = vmatprep.subr.bf16.mxu0 0
          %521 = vmatpush1.bf16.msra.mxu0 0
          %522 = vmatprep.subr.bf16.mxu0 0
          %523 = vmatpush1.bf16.msra.mxu0 0
          %524 = vmatprep.subr.bf16.mxu0 0
          %525 = vmatpush1.bf16.msra.mxu0 0
          %526 = vmatprep.subr.bf16.mxu0 0
          %527 = vmatpush1.bf16.msra.mxu0 0
          %528 = vmatprep.subr.bf16.mxu0 0
          %529 = vmatpush1.bf16.msra.mxu0 0
          %530 = vmatprep.subr.bf16.mxu0 0
          %531 = vmatpush1.bf16.msra.mxu0 0
          %532 = vmatprep.subr.bf16.mxu0 0
          %533 = vmatpush1.bf16.msra.mxu0 0
          %534 = vmatprep.subr.bf16.mxu0 0
          %535 = vmatpush1.bf16.msra.mxu0 0
          %536 = vmatprep.subr.bf16.mxu0 0
          %537 = vmatpush1.bf16.msra.mxu0 0
          %538 = vmatprep.subr.bf16.mxu0 0
          %539 = vmatpush1.bf16.msra.mxu0 0
          %540 = vmatprep.subr.bf16.mxu0 0
          %541 = vmatpush1.bf16.msra.mxu0 0
          %542 = vmatprep.mubr.bf16.mxu0 0
          %543 = vmatmul.mubr.bf16.gmra.mrb[0].mxu0 %v505
          %v544 = vpop.f32.mrb[0].mxu0
          %v545 = vadd.f32 %v476, %v544
          %v546 = vpop.f32.mrb[0].mxu0
          %v547 = vpop.f32.mrb[0].mxu0
          %v548 = vadd.f32 %v481, %v547
          %v549 = vpop.f32.mrb[0].mxu0
          %550 = vmatprep.mubr.bf16.mxu0 0
          %551 = vmatmul.mubr.bf16.gmra.mrb[0].mxu0 %v508
          %v552 = vpop.f32.mrb[0].mxu0
          %v553 = vadd.f32 %v486, %v552
          %v554 = vpop.f32.mrb[0].mxu0
          %v555 = vpop.f32.mrb[0].mxu0
          %v556 = vadd.f32 %v491, %v555
          %v557 = vpop.f32.mrb[0].mxu0
          %558 = vdwg.mxu0
          %v559 = vmax.f32 %v545, 0.0
          %v560 = vmax.f32 %v548, 0.0
          %v561 = vmax.f32 %v553, 0.0
          %v562 = vmax.f32 %v556, 0.0
          %v563 = vpack.c.bf16 %v560, %v559
          %v564 = vpack.c.bf16 %v562, %v561
          %566 = vset.pattern.permute.xlu0 0
          %567 = vperm.xlu0 %566, %v460
          %v568 = vpop.permute.xlu0 %567
          %571 = vset.pattern.permute.xlu0 0
          %572 = vperm.xlu0 %571, %v461
          %v573 = vpop.permute.xlu0 %572
          %576 = vset.pattern.permute.xlu0 0
          %577 = vperm.xlu0 %576, %v462
          %v578 = vpop.permute.xlu0 %577
          %581 = vset.pattern.permute.xlu0 0
          %582 = vperm.xlu0 %581, %v463
          %v583 = vpop.permute.xlu0 %582
          %v589 = vunpack.c.l.b16 %v456
          %v590 = vunpack.c.l.b16 %v457
          %v591 = vunpack.c.l.b16 %v458
          %v592 = vunpack.c.l.b16 %v459
          %v593 = vpack.c.b16 %v590, %v589
          %v594 = vpack.c.b16 %v592, %v591
          %vm595 = vcmask 261120
          %v597 = vsel %vm595, %v593, 0
          %v600 = vsel %vm595, %v594, 0
          %602 = vmatprep.subr.bf16.mxu0 0
          %603 = vmatpush1.bf16.msra.mxu0 %v563
          %604 = vmatprep.subr.bf16.mxu0 0
          %605 = vmatpush1.bf16.msra.mxu0 %v564
          %606 = vmatprep.subr.bf16.mxu0 0
          %607 = vmatpush1.bf16.msra.mxu0 0
          %608 = vmatprep.subr.bf16.mxu0 0
          %609 = vmatpush1.bf16.msra.mxu0 0
          %610 = vmatprep.subr.bf16.mxu0 0
          %611 = vmatpush1.bf16.msra.mxu0 0
          %612 = vmatprep.subr.bf16.mxu0 0
          %613 = vmatpush1.bf16.msra.mxu0 0
          %614 = vmatprep.subr.bf16.mxu0 0
          %615 = vmatpush1.bf16.msra.mxu0 0
          %616 = vmatprep.subr.bf16.mxu0 0
          %617 = vmatpush1.bf16.msra.mxu0 0
          %618 = vmatprep.subr.bf16.mxu0 0
          %619 = vmatpush1.bf16.msra.mxu0 0
          %620 = vmatprep.subr.bf16.mxu0 0
          %621 = vmatpush1.bf16.msra.mxu0 0
          %622 = vmatprep.subr.bf16.mxu0 0
          %623 = vmatpush1.bf16.msra.mxu0 0
          %624 = vmatprep.subr.bf16.mxu0 0
          %625 = vmatpush1.bf16.msra.mxu0 0
          %626 = vmatprep.subr.bf16.mxu0 0
          %627 = vmatpush1.bf16.msra.mxu0 0
          %628 = vmatprep.subr.bf16.mxu0 0
          %629 = vmatpush1.bf16.msra.mxu0 0
          %630 = vmatprep.subr.bf16.mxu0 0
          %631 = vmatpush1.bf16.msra.mxu0 0
          %632 = vmatprep.subr.bf16.mxu0 0
          %633 = vmatpush1.bf16.msra.mxu0 0
          %634 = vmatprep.mubr.bf16.mxu0 0
          %635 = vmatmul.mubr.bf16.gmra.mrb[0].mxu0 %v597
          %v636 = vpop.f32.mrb[0].mxu0
          %v637 = vadd.f32 %v568, %v636
          %v638 = vpop.f32.mrb[0].mxu0
          %v639 = vpop.f32.mrb[0].mxu0
          %v640 = vadd.f32 %v573, %v639
          %v641 = vpop.f32.mrb[0].mxu0
          %642 = vmatprep.mubr.bf16.mxu0 0
          %643 = vmatmul.mubr.bf16.gmra.mrb[0].mxu0 %v600
          %v644 = vpop.f32.mrb[0].mxu0
          %v645 = vadd.f32 %v578, %v644
          %v646 = vpop.f32.mrb[0].mxu0
          %v647 = vpop.f32.mrb[0].mxu0
          %v648 = vadd.f32 %v583, %v647
          %v649 = vpop.f32.mrb[0].mxu0
          %650 = vdwg.mxu0
          %v651 = vmax.f32 %v637, 0.0
          %v652 = vmax.f32 %v640, 0.0
          %v653 = vmax.f32 %v645, 0.0
          %v654 = vmax.f32 %v648, 0.0
          %v655 = vpack.c.bf16 %v652, %v651
          %v656 = vpack.c.bf16 %v654, %v653
          %658 = vset.pattern.permute.xlu0 0
          %659 = vperm.xlu0 %658, %v468
          %v660 = vpop.permute.xlu0 %659
          %663 = vset.pattern.permute.xlu0 0
          %664 = vperm.xlu0 %663, %v469
          %v665 = vpop.permute.xlu0 %664
          %668 = vset.pattern.permute.xlu0 0
          %669 = vperm.xlu0 %668, %v470
          %v670 = vpop.permute.xlu0 %669
          %673 = vset.pattern.permute.xlu0 0
          %674 = vperm.xlu0 %673, %v471
          %v675 = vpop.permute.xlu0 %674
          %v681 = vunpack.c.l.b16 %v464
          %v682 = vunpack.c.l.b16 %v465
          %v683 = vunpack.c.l.b16 %v466
          %v684 = vunpack.c.l.b16 %v467
          %v685 = vpack.c.b16 %v682, %v681
          %v686 = vpack.c.b16 %v684, %v683
          %v688 = vsel %vm595, %v685, 0
          %v691 = vsel %vm595, %v686, 0
          %693 = vmatprep.subr.bf16.mxu0 0
          %694 = vmatpush1.bf16.msra.mxu0 %v655
          %695 = vmatprep.subr.bf16.mxu0 0
          %696 = vmatpush1.bf16.msra.mxu0 %v656
          %697 = vmatprep.subr.bf16.mxu0 0
          %698 = vmatpush1.bf16.msra.mxu0 0
          %699 = vmatprep.subr.bf16.mxu0 0
          %700 = vmatpush1.bf16.msra.mxu0 0
          %701 = vmatprep.subr.bf16.mxu0 0
          %702 = vmatpush1.bf16.msra.mxu0 0
          %703 = vmatprep.subr.bf16.mxu0 0
          %704 = vmatpush1.bf16.msra.mxu0 0
          %705 = vmatprep.subr.bf16.mxu0 0
          %706 = vmatpush1.bf16.msra.mxu0 0
          %707 = vmatprep.subr.bf16.mxu0 0
          %708 = vmatpush1.bf16.msra.mxu0 0
          %709 = vmatprep.subr.bf16.mxu0 0
          %710 = vmatpush1.bf16.msra.mxu0 0
          %711 = vmatprep.subr.bf16.mxu0 0
          %712 = vmatpush1.bf16.msra.mxu0 0
          %713 = vmatprep.subr.bf16.mxu0 0
          %714 = vmatpush1.bf16.msra.mxu0 0
          %715 = vmatprep.subr.bf16.mxu0 0
          %716 = vmatpush1.bf16.msra.mxu0 0
          %717 = vmatprep.subr.bf16.mxu0 0
          %718 = vmatpush1.bf16.msra.mxu0 0
          %719 = vmatprep.subr.bf16.mxu0 0
          %720 = vmatpush1.bf16.msra.mxu0 0
          %721 = vmatprep.subr.bf16.mxu0 0
          %722 = vmatpush1.bf16.msra.mxu0 0
          %723 = vmatprep.subr.bf16.mxu0 0
          %724 = vmatpush1.bf16.msra.mxu0 0
          %725 = vmatprep.mubr.bf16.mxu0 0
          %726 = vmatmul.mubr.bf16.gmra.mrb[0].mxu0 %v688
          %v727 = vpop.f32.mrb[0].mxu0
          %v728 = vadd.f32 %v660, %v727
          %v729 = vpop.f32.mrb[0].mxu0
          %v730 = vpop.f32.mrb[0].mxu0
          %v731 = vadd.f32 %v665, %v730
          %v732 = vpop.f32.mrb[0].mxu0
          %733 = vmatprep.mubr.bf16.mxu0 0
          %734 = vmatmul.mubr.bf16.gmra.mrb[0].mxu0 %v691
          %v735 = vpop.f32.mrb[0].mxu0
          %v736 = vadd.f32 %v670, %v735
          %v737 = vpop.f32.mrb[0].mxu0
          %v738 = vpop.f32.mrb[0].mxu0
          %v739 = vadd.f32 %v675, %v738
          %v740 = vpop.f32.mrb[0].mxu0
          %741 = vdwg.mxu0
          %v742 = vsub.f32 %v446, %v728
          %v743 = vsub.f32 %v447, %v731
          %v744 = vmul.f32 %v736, -0.5
          %v745 = vmul.f32 %v739, -0.5
          %v746 = vmul.f32 %v744, 1.442695
          %v747 = vpow.pop %v746
          %v748 = vmul.f32 %v745, 1.442695
          %v749 = vpow.pop %v748
          %v750 = vmul.f32 %v742, %v747
          %v751 = vmul.f32 %v743, %v749
          %v752 = vadd.f32 %v744, %v745
          %v753 = vrot.slane %v752, 4
          %v754 = vadd.f32 %v752, %v753
          %v755 = vrot.slane %v754, 2
          %v756 = vadd.f32 %v754, %v755
          %v757 = vrot.slane %v756, 1
          %v758 = vadd.f32 %v756, %v757
          %s759 = smul.u32 %s33, 16
          %s760 = scalar_lea.vmem [#allocation2], %s759
          %761 = vst [vmem:[%s760] sm:$0xff] %v750
          %762 = vst [vmem:[%s760 + $0x8] sm:$0xff] %v751
          %s763 = scalar_lea.vmem [#allocation3], %s33
          %764 = vst [vmem:[%s763] sm:$0x1] %v758
          %s765 = smul.u32 %s33, 128
          %v766 = vlaneseq
          %v767 = vand.u32 %v766, 127
          %v768 = vstv %s765
          %v769 = vadd.s32 %v767, %v768
          %vm770 = vcmp.lt.s32.totalorder %v769, 500
          %v771 = vsel %vm770, 1.0, 0.0
          %v772 = vmul.f32 %v750, %v771
          %v773 = vmul.f32 %v751, %v771
          %774 = vadd.xlane.f32.xlu0 %v772
          %v775 = vpop.xlane.xlu0 %774
          %776 = vadd.xlane.f32.xlu0 %v773
          %v777 = vpop.xlane.xlu0 %776
          %v778 = vmul.f32 %v772, %v750
          %v779 = vmul.f32 %v773, %v751
          %780 = vadd.xlane.f32.xlu0 %v778
          %v781 = vpop.xlane.xlu0 %780
          %782 = vadd.xlane.f32.xlu0 %v779
          %v783 = vpop.xlane.xlu0 %782
          %v784 = vld [vmem:[#allocation4] sm:$0xff]
          %v785 = vld [vmem:[#allocation4 + $0x8] sm:$0xff]
          %v786 = vadd.f32 %v784, %v775
          %v787 = vadd.f32 %v785, %v777
          %vm788 = vcmask 7168
          %789 = vst.msk [vmem:[#allocation4] sm:$0xff] %vm788, %v786
          %790 = vst.msk [vmem:[#allocation4 + $0x8] sm:$0xff] %vm788, %v787
          %v791 = vld [vmem:[#allocation5] sm:$0xff]
          %v792 = vld [vmem:[#allocation5 + $0x8] sm:$0xff]
          %v793 = vadd.f32 %v791, %v781
          %v794 = vadd.f32 %v792, %v783
          %795 = vst.msk [vmem:[#allocation5] sm:$0xff] %vm788, %v793
          %796 = vst.msk [vmem:[#allocation5 + $0x8] sm:$0xff] %vm788, %v794
        $region98: #{tpu_custom_call.1} parent=89 // pred_fallthru
          _
        %p797 = scmp.eq.s32.totalorder %s32, 1
        // Predicated region
        $region103: #{tpu_custom_call.1} parent=89 // pred_check
          %p798 = pneg %p797
        $region104: #{tpu_custom_call.1} parent=89 // pred_check_branch
          %800 = sbr.rel (%p798) target = $region106
        $region105: #{tpu_custom_call.1} parent=89 // pred_region
          %v801 = vld [vmem:[#allocation4] sm:$0xff]
          %v802 = vld [vmem:[#allocation4 + $0x8] sm:$0xff]
          %v803 = vld [vmem:[#allocation5] sm:$0xff]
          %v804 = vld [vmem:[#allocation5 + $0x8] sm:$0xff]
          %v805 = vld [vmem:[%s7] sm:$0xff]
          %v806 = vld [vmem:[%s7 + $0x8] sm:$0xff]
          %v807 = vld [vmem:[%s8] sm:$0xff]
          %v808 = vld [vmem:[%s8 + $0x8] sm:$0xff]
          %v809 = vmul.f32 %v801, 0.002
          %v810 = vmul.f32 %v802, 0.002
          %v811 = vmul.f32 %v803, 0.002
          %v812 = vmul.f32 %v804, 0.002
          %v813 = vmul.f32 %v809, %v809
          %v814 = vmul.f32 %v810, %v810
          %v815 = vsub.f32 %v811, %v813
          %v816 = vsub.f32 %v812, %v814
          %v817 = vadd.f32 %v815, 1e-06
          %v818 = vadd.f32 %v816, 1e-06
          %v819 = vrsqrt.pop %v817
          %v820 = vrsqrt.pop %v818
          %v821 = vmul.f32 %v805, 1.442695
          %v822 = vpow.pop %v821
          %v823 = vmul.f32 %v806, 1.442695
          %v824 = vpow.pop %v823
          %v825 = vmul.f32 %v819, %v822
          %v826 = vmul.f32 %v820, %v824
          %v827 = vmul.f32 %v809, %v825
          %v828 = vmul.f32 %v810, %v826
          %v829 = vsub.f32 %v807, %v827
          %v830 = vsub.f32 %v808, %v828
          %v831 = vadd.f32 %v817, 1e-06
          %v832 = vadd.f32 %v818, 1e-06
          %v833 = vlog2.pop %v831
          %v834 = vmul.f32 %v833, 0.6931472
          %v835 = vlog2.pop %v832
          %v836 = vmul.f32 %v835, 0.6931472
          %v837 = vmul.f32 %v834, 0.5
          %v838 = vmul.f32 %v836, 0.5
          %v839 = vsub.f32 %v805, %v837
          %v840 = vsub.f32 %v806, %v838
          %vm841 = vcmask 7168
          %v842 = vsel %vm841, %v839, 0.0
          %v843 = vsel %vm841, %v840, 0.0
          %v844 = vadd.f32 %v842, %v843
          %845 = vadd.xlane.f32.xlu0 %v844
          %v846 = vpop.xlane.xlu0 %845
          %v847 = vrot.slane %v846, 4
          %v848 = vadd.f32 %v846, %v847
          %v849 = vrot.slane %v848, 2
          %v850 = vadd.f32 %v848, %v849
          %v851 = vrot.slane %v850, 1
          %v852 = vadd.f32 %v850, %v851
          %s853 = vtos %v852
          %s854 = smul.u32 %s33, 16
          %s855 = scalar_lea.vmem [#allocation2], %s854
          %v856 = vld [vmem:[%s855] sm:$0xff]
          %v857 = vld [vmem:[%s855 + $0x8] sm:$0xff]
          %s858 = scalar_lea.vmem [#allocation3], %s33
          %v859 = vld [vmem:[%s858] sm:$0x1]
          %861 = vset.pattern.permute.xlu0 0
          %862 = vperm.xlu0 %861, %v825
          %v863 = vpop.permute.xlu0 %862
          %866 = vset.pattern.permute.xlu0 0
          %867 = vperm.xlu0 %866, %v826
          %v868 = vpop.permute.xlu0 %867
          %v870 = vmul.f32 %v856, %v863
          %v871 = vmul.f32 %v857, %v868
          %873 = vset.pattern.permute.xlu0 0
          %874 = vperm.xlu0 %873, %v829
          %v875 = vpop.permute.xlu0 %874
          %878 = vset.pattern.permute.xlu0 0
          %879 = vperm.xlu0 %878, %v830
          %v880 = vpop.permute.xlu0 %879
          %v882 = vadd.f32 %v870, %v875
          %v883 = vadd.f32 %v871, %v880
          %884 = vst [vmem:[%s427] sm:$0xff] %v882
          %885 = vst [vmem:[%s427 + $0x8] sm:$0xff] %v883
          %v886 = vstv %s853
          %v887 = vadd.f32 %v859, %v886
          %888 = vst [vmem:[%s420] sm:$0x1] %v887
        $region106: #{tpu_custom_call.1} parent=89 // pred_fallthru
          _
        %s889 = sand.u32 %s248, 1
        %s890 = scalar_lea.sflag [#allocation8], %s889
        %s891 = sand.u32 %s248, 1
        %s892 = scalar_lea.vmem [#allocation7], %s891
        %s893 = sand.u32 %s276, 1
        %s894 = scalar_lea.sflag [#allocation10], %s893
        %s895 = sand.u32 %s276, 1
        %s896 = smul.addr %s895, 16
        %s897 = scalar_lea.vmem [#allocation9], %s896
        // Predicated region
        $region107: #{tpu_custom_call.1} parent=89 // pred_check
          %p898 = pneg %p258
        $region108: #{tpu_custom_call.1} parent=89 // pred_check_branch
          %900 = sbr.rel (%p898) target = $region110
        $region109: #{tpu_custom_call.1} parent=89 // pred_region
          %s901 = smul.u32 %s33, %s32
          %s903 = ssub.s32 16, 16
          %904 = vsyncadd %s890, %s903
          %s905 = smul.addr %s901, 16
          %s906 = scalar_lea.hbm %s9, %s905
          %s908 = sshll.u32 %s892, 4
          %s909 = int_to_ptr.vmem [resolvable:$true] %s908
          %911 = dma.vmem_to_hbm [thread:$0]  %s909, 16, %s906, %s890
        $region110: #{tpu_custom_call.1} parent=89 // pred_fallthru
          _
        // Predicated region
        $region111: #{tpu_custom_call.1} parent=89 // pred_check
          %p912 = pneg %p286
        $region112: #{tpu_custom_call.1} parent=89 // pred_check_branch
          %914 = sbr.rel (%p912) target = $region114
        $region113: #{tpu_custom_call.1} parent=89 // pred_region
          %s915 = smul.u32 %s33, %s32
          %s917 = ssub.s32 256, 256
          %918 = vsyncadd %s894, %s917
          %s919 = smul.addr %s915, 128
          %s920 = scalar_lea.hbm %s10, %s919
          %s921 = sshll.u32 %s897, 4
          %s922 = int_to_ptr.vmem [resolvable:$true] %s921
          %927 = dma.vmem_to_hbm [thread:$0]  %s922, 256, %s920, %s894, 128, 512, 8
        $region114: #{tpu_custom_call.1} parent=89 // pred_fallthru
          _
      $region90: #{tpu_custom_call.1} parent=5 // pred_fallthru
        _
      %p928 = scmp.le.s32.totalorder 2, %s23
      // Predicated region
      $region115: #{tpu_custom_call.1} parent=5 // pred_check
        %p929 = pneg %p928
      $region116: #{tpu_custom_call.1} parent=5 // pred_check_branch
        %931 = sbr.rel (%p929) target = $region118
      $region117: #{tpu_custom_call.1} parent=5 // pred_region
        %s932 = ssub.s32 %s23, 2
        // Predicated region
        $region119: #{tpu_custom_call.1} parent=117 // pred_check
          %p933 = pneg %p264
        $region120: #{tpu_custom_call.1} parent=117 // pred_check_branch
          %935 = sbr.rel (%p933) target = $region122
        $region121: #{tpu_custom_call.1} parent=117 // pred_region
          %s936 = sand.u32 %s249, 1
          %s937 = scalar_lea.sflag [#allocation8], %s936
          %s938 = sand.u32 %s249, 1
          %s939 = scalar_lea.vmem [#allocation7], %s938
          %940 = dma.done %s937, 16
        $region122: #{tpu_custom_call.1} parent=117 // pred_fallthru
          _
        // Predicated region
        $region123: #{tpu_custom_call.1} parent=117 // pred_check
          %p941 = pneg %p292
        $region124: #{tpu_custom_call.1} parent=117 // pred_check_branch
          %943 = sbr.rel (%p941) target = $region126
        $region125: #{tpu_custom_call.1} parent=117 // pred_region
          %s944 = sand.u32 %s277, 1
          %s945 = scalar_lea.sflag [#allocation10], %s944
          %s946 = sand.u32 %s277, 1
          %s947 = smul.addr %s946, 16
          %s948 = scalar_lea.vmem [#allocation9], %s947
          %949 = dma.done %s945, 256
        $region126: #{tpu_custom_call.1} parent=117 // pred_fallthru
          _
      $region118: #{tpu_custom_call.1} parent=5 // pred_fallthru
        _
    $region6: #{tpu_custom_call.1} parent=1 // loop_footer
      %s27 = sadd.s32 1, %s23
    $region7: #{tpu_custom_call.1} parent=1 // loop_footer_branch
      %22 = sbr.rel target = $region3
    $region8: #{tpu_custom_call.1} parent=1 // loop_exit
      _
    %950 = vsyncpa [#allocation8], 1
    %s951 = scalar_lea.sflag [#allocation8], 1
    %952 = vsyncpa %s951, 1
    %953 = vsyncpa [#allocation10], 1
    %s954 = scalar_lea.sflag [#allocation10], 1
    %955 = vsyncpa %s954, 1

</llo_original>
